<compile_context>
chip_gen: v5e
topology: v5e:2x2
jax: 0.10.0
libtpu: 0.0.40
codegen_flags: <defaults>
</compile_context>

<pallas_src>
import functools
import math

import jax
import jax.numpy as jnp
from jax.experimental import pallas as pl
from jax.experimental.pallas import tpu as pltpu

LANE = 128


def _round_up(x, m):
    return ((x + m - 1) // m) * m


def _vmem_capacity_bytes():
    try:
        return int(pltpu.get_tpu_info().vmem_capacity_bytes)
    except Exception:
        return 64 << 20  # conservative default (v7x per-TC VMEM)


def _pick_tile(npad, target):
    """Largest multiple of 128 that divides npad and is <= target."""
    m = npad // LANE
    best = 1
    for d in range(1, m + 1):
        if m % d == 0 and d * LANE <= max(target, LANE):
            best = d
    return best * LANE


# ----------------------------------------------------------------------------
# Kernel 1: fully fused multi-layer GCN (adjacency resident in VMEM, grid=())
# ----------------------------------------------------------------------------
def gcn_fused_kernel(*refs, num_layers, relu_flags, agg_first_flags):
    # refs = (h, adj, w0, b0, w1, b1, ..., out); per-layer padded shapes.
    h_ref, adj_ref = refs[0], refs[1]
    out_ref = refs[-1]
    adj = adj_ref[...]            # loaded once, reused across all layers
    h = h_ref[...]
    for l in range(num_layers):
        w = refs[2 + 2 * l][...]  # [fin_p, fout_p]
        b = refs[3 + 2 * l][...]  # [1, fout_p]
        if agg_first_flags[l]:    # fout < fin: aggregate on the narrow side
            h = jnp.dot(adj, h, preferred_element_type=jnp.float32)
            h = jnp.dot(h, w, preferred_element_type=jnp.float32)
        else:
            h = jnp.dot(h, w, preferred_element_type=jnp.float32)
            h = jnp.dot(adj, h, preferred_element_type=jnp.float32)
        h = h + b
        if relu_flags[l]:
            h = jnp.maximum(h, 0.0)
    out_ref[...] = h.astype(out_ref.dtype)


def gcn_forward_fused(h_pad, padded_params, adj_hat_pad, *, vmem_limit_bytes):
    npad, fin0_p = h_pad.shape
    L = len(padded_params)
    fout_last_p = padded_params[-1][0].shape[1]
    relu_flags = tuple(p[2] for p in padded_params)
    agg_first_flags = tuple(p[3] for p in padded_params)

    kernel = functools.partial(gcn_fused_kernel, num_layers=L,
                               relu_flags=relu_flags,
                               agg_first_flags=agg_first_flags)

    in_specs = [pl.BlockSpec((npad, fin0_p), lambda: (0, 0)),
                pl.BlockSpec((npad, npad), lambda: (0, 0))]
    args = [h_pad, adj_hat_pad]
    for (wp, bp, _, _) in padded_params:          # per-layer weights/biases
        in_specs.append(pl.BlockSpec(wp.shape, lambda: (0, 0)))
        in_specs.append(pl.BlockSpec(bp.shape, lambda: (0, 0)))
        args.extend([wp, bp])

    return pl.pallas_call(
        kernel,
        out_shape=jax.ShapeDtypeStruct((npad, fout_last_p), jnp.float32),
        in_specs=in_specs,
        out_specs=pl.BlockSpec((npad, fout_last_p), lambda: (0, 0)),
        compiler_params=pltpu.CompilerParams(
            vmem_limit_bytes=vmem_limit_bytes),
    )(*args)


def _fused_vmem_estimate(npad, fin0_p, padded_params):
    """Single-buffered residency estimate (grid=() => one pipeline step):
    adjacency + input h + output + all W/b + headroom for the ~3 live
    (npad, fp) f32 per-layer matmul temporaries Mosaic materializes."""
    fout_last_p = padded_params[-1][0].shape[1]
    max_fp = max([fin0_p] + [p[0].shape[1] for p in padded_params])
    w_elems = sum(int(p[0].size) + int(p[1].size) for p in padded_params)
    return 4 * (npad * npad + npad * fin0_p + npad * fout_last_p
                + w_elems + 3 * npad * max_fp)


# ----------------------------------------------------------------------------
# Kernel 2a (fout >= fin): out[i] = act( sum_k A[i,k] @ (h[k] @ W) + b )
# W transform fused into the k-loop; accumulate directly into o_ref (f32).
# ----------------------------------------------------------------------------
def transform_then_agg_kernel(a_ref, h_ref, w_ref, b_ref, o_ref, *, relu):
    k = pl.program_id(1)

    @pl.when(k == 0)
    def _():
        o_ref[...] = jnp.zeros_like(o_ref)

    t = jnp.dot(h_ref[...], w_ref[...], preferred_element_type=jnp.float32)
    o_ref[...] += jnp.dot(a_ref[...], t, preferred_element_type=jnp.float32)

    @pl.when(k == pl.num_programs(1) - 1)
    def _():
        r = o_ref[...] + b_ref[...]
        if relu:
            r = jnp.maximum(r, 0.0)
        o_ref[...] = r


# ----------------------------------------------------------------------------
# Kernel 2b (fout < fin): out[i] = act( (sum_k A[i,k] @ h[k]) @ W + b )
# Aggregate into a wide f32 scratch; apply W/b/relu in the last-k epilogue.
# ----------------------------------------------------------------------------
def agg_then_transform_kernel(a_ref, h_ref, w_ref, b_ref, o_ref, acc_ref, *,
                              relu):
    k = pl.program_id(1)

    @pl.when(k == 0)
    def _():
        acc_ref[...] = jnp.zeros_like(acc_ref)

    acc_ref[...] += jnp.dot(a_ref[...], h_ref[...],
                            preferred_element_type=jnp.float32)

    @pl.when(k == pl.num_programs(1) - 1)
    def _():
        r = jnp.dot(acc_ref[...], w_ref[...],
                    preferred_element_type=jnp.float32)
        r = r + b_ref[...]
        if relu:
            r = jnp.maximum(r, 0.0)
        o_ref[...] = r.astype(o_ref.dtype)


def _gcn_layer_tiled(adj_hat, h, wp, bp, relu, agg_first, *, tile_m, tile_k,
                     cap):
    npad = adj_hat.shape[0]
    fin_p, fout_p = wp.shape
    assert npad % tile_m == 0 and npad % tile_k == 0

    in_specs = [
        pl.BlockSpec((tile_m, tile_k), lambda i, k: (i, k)),   # A_hat tile
        pl.BlockSpec((tile_k, fin_p), lambda i, k: (k, 0)),    # h row tile
        pl.BlockSpec((fin_p, fout_p), lambda i, k: (0, 0)),    # W (resident)
        pl.BlockSpec((1, fout_p), lambda i, k: (0, 0)),        # b (resident)
    ]
    out_spec = pl.BlockSpec((tile_m, fout_p), lambda i, k: (i, 0))

    # Explicit buffer math (double-buffered A/h/out tiles + resident W/b),
    # plus headroom; default scoped VMEM would otherwise cap the tile size.
    need = 4 * (2 * tile_m * tile_k + 2 * tile_k * fin_p
                + 2 * tile_m * fout_p + 2 * fin_p * fout_p + 2 * fout_p)

    if agg_first:
        scratch = [pltpu.VMEM((tile_m, fin_p), jnp.float32)]
        need += 4 * tile_m * fin_p
        kernel = functools.partial(agg_then_transform_kernel, relu=relu)
    else:
        scratch = []
        kernel = functools.partial(transform_then_agg_kernel, relu=relu)

    vmem_limit = int(min(max(need + (8 << 20), 32 << 20), int(0.7 * cap)))

    return pl.pallas_call(
        kernel,
        out_shape=jax.ShapeDtypeStruct((npad, fout_p), jnp.float32),
        grid_spec=pltpu.PrefetchScalarGridSpec(
            num_scalar_prefetch=0,
            grid=(npad // tile_m, npad // tile_k),   # reduction axis last
            in_specs=in_specs,
            out_specs=out_spec,
            scratch_shapes=scratch),
        compiler_params=pltpu.CompilerParams(
            dimension_semantics=("parallel", "arbitrary"),
            vmem_limit_bytes=vmem_limit),
    )(adj_hat, h, wp, bp)


def gcn_forward_tiled(h, padded_params, adj_hat, *, tile_m, tile_k, cap):
    for (wp, bp, relu, agg_first) in padded_params:
        h = _gcn_layer_tiled(adj_hat, h, wp, bp, relu, agg_first,
                             tile_m=tile_m, tile_k=tile_k, cap=cap)
    return h


# ----------------------------------------------------------------------------
# Parameter init (mimics GCNLayer.reset_parameters) + per-layer padding
# ----------------------------------------------------------------------------
def init_gcn_params(key, in_feats, n_hidden, n_classes, n_layers):
    """Returns a list of (weight [fin,fout], bias [1,fout], apply_relu)."""
    dims = [(in_feats, n_hidden)] + \
           [(n_hidden, n_hidden)] * (n_layers - 1) + \
           [(n_hidden, n_classes)]
    params = []
    for li, (fin, fout) in enumerate(dims):
        key, kw, kb = jax.random.split(key, 3)
        stdv = 1.0 / math.sqrt(fout)
        w = jax.random.uniform(kw, (fin, fout), jnp.float32, -stdv, stdv)
        b = jax.random.uniform(kb, (1, fout), jnp.float32, -stdv, stdv)
        apply_relu = li < len(dims) - 1          # last layer: activation=None
        params.append((w, b, apply_relu))
    return params


def _pad_params(params):
    """Per-layer zero-pad: W -> [round_up(fin,128), round_up(fout,128)]."""
    out = []
    for (w, b, relu) in params:
        fin, fout = w.shape
        fin_p, fout_p = _round_up(fin, LANE), _round_up(fout, LANE)
        wp = jnp.zeros((fin_p, fout_p), jnp.float32).at[:fin, :fout].set(w)
        bp = jnp.zeros((1, fout_p), jnp.float32).at[:, :fout].set(
            jnp.reshape(b, (1, -1)))
        out.append((wp, bp, relu, fout < fin))   # agg_first when Fout < Fin
    return out


# ----------------------------------------------------------------------------
# Forward wrapper: fold norm, pad, pick fused vs tiled path
# ----------------------------------------------------------------------------
def gcn_forward(features, params, adj, norm, *, path="auto", tile_target=512):
    N, in_feats = features.shape
    n_classes = params[-1][0].shape[1]
    fin0_p = _round_up(in_feats, LANE)

    # Fold the symmetric normalization into the adjacency once (amortized
    # across all layers): A_hat = diag(norm) @ A @ diag(norm).
    adj_hat = (norm * adj) * norm.T

    padded_params = _pad_params(params)
    cap = _vmem_capacity_bytes()

    if path == "auto":
        npad_f = _round_up(N, 8)
        est = _fused_vmem_estimate(npad_f, fin0_p, padded_params)
        # The fused path runs on ONE TensorCore; the tiled path shards row
        # tiles across both v7x TCs, so aggregation-dominated sizes go tiled
        # even if the fused path would fit in VMEM.
        path = "fused" if (est <= int(0.55 * cap) and npad_f <= 2048) \
            else "tiled"

    if path == "fused":
        npad = _round_up(N, 8)
        h = jnp.zeros((npad, fin0_p), jnp.float32).at[:N, :in_feats].set(
            features)
        a = jnp.zeros((npad, npad), jnp.float32).at[:N, :N].set(adj_hat)
        est = _fused_vmem_estimate(npad, fin0_p, padded_params)
        vmem_limit = int(min(max(est + (8 << 20), 32 << 20), int(0.8 * cap)))
        out = gcn_forward_fused(h, padded_params, a,
                                vmem_limit_bytes=vmem_limit)
        fout_last = padded_params[-1][0].shape[1]
        del fout_last
    else:
        npad = _round_up(N, LANE)          # pad to 128, not to the tile size
        tile = _pick_tile(npad, tile_target)
        h = jnp.zeros((npad, fin0_p), jnp.float32).at[:N, :in_feats].set(
            features)
        a = jnp.zeros((npad, npad), jnp.float32).at[:N, :N].set(adj_hat)
        out = gcn_forward_tiled(h, padded_params, a,
                                tile_m=tile, tile_k=tile, cap=cap)
    return out[:N, :n_classes]


# ----------------------------------------------------------------------------
# Graph construction (deterministic ring graph with self-loops)
# ----------------------------------------------------------------------------
def build_graph(n_nodes):
    i = jnp.arange(n_nodes)
    adj = jnp.zeros((n_nodes, n_nodes), jnp.float32)
    adj = adj.at[i, i].set(1.0)                     # self loops
    adj = adj.at[i, (i + 1) % n_nodes].set(1.0)     # edge (i+1) -> i
    adj = adj.at[i, (i - 1) % n_nodes].set(1.0)     # edge (i-1) -> i
    deg = adj.sum(axis=1, keepdims=True)            # in-degree
    norm = 1.0 / jnp.sqrt(deg)                      # DGL-style sym norm
    return adj, norm


# ----------------------------------------------------------------------------
# Pure-JAX reference (original un-folded formulation) for correctness check
# ----------------------------------------------------------------------------
def gcn_forward_ref(features, params, adj, norm):
    h = features
    for (w, b, apply_relu) in params:
        h = h @ w
        h = h * norm
        h = adj @ h
        h = h * norm
        h = h + b
        if apply_relu:
            h = jnp.maximum(h, 0.0)
    return h


if __name__ == "__main__":
    key = jax.random.PRNGKey(0)
    in_feats, n_hidden, n_classes, n_layers = 16, 32, 8, 2

    key, kp = jax.random.split(key)
    params = init_gcn_params(kp, in_feats, n_hidden, n_classes, n_layers)

    # --- small graph: fully fused multi-layer kernel (A resident in VMEM) ----
    n_small = 64
    key, kf = jax.random.split(key)
    feats_s = jax.random.normal(kf, (n_small, in_feats), jnp.float32)
    adj_s, norm_s = build_graph(n_small)
    out_s = jax.block_until_ready(
        gcn_forward(feats_s, params, adj_s, norm_s, path="fused"))
    ref_s = gcn_forward_ref(feats_s, params, adj_s, norm_s)
    assert out_s.shape == (n_small, n_classes)
    assert jnp.allclose(out_s, ref_s, atol=1e-4, rtol=1e-4)

    # --- larger graph: tiled per-layer fused transform+aggregation kernels ---
    n_big = 256
    key, kf2 = jax.random.split(key)
    feats_b = jax.random.normal(kf2, (n_big, in_feats), jnp.float32)
    adj_b, norm_b = build_graph(n_big)
    out_b = jax.block_until_ready(
        gcn_forward(feats_b, params, adj_b, norm_b, path="tiled",
                    tile_target=512))
    ref_b = gcn_forward_ref(feats_b, params, adj_b, norm_b)
    assert out_b.shape == (n_big, n_classes)
    assert jnp.allclose(out_b, ref_b, atol=1e-4, rtol=1e-4)

    # --- auto path selection also runs ---------------------------------------
    out_a = jax.block_until_ready(
        gcn_forward(feats_s, params, adj_s, norm_s, path="auto"))
    assert jnp.allclose(out_a, ref_s, atol=1e-4, rtol=1e-4)

    print("KERNEL_OK")
</pallas_src>

<mosaic_0001>
module attributes {stable_mosaic.version = 11 : i64} {
  func.func @gcn_fused_kernel(%arg0: memref<64x128xf32, #tpu.memory_space<vmem>>, %arg1: memref<64x64xf32, #tpu.memory_space<vmem>>, %arg2: memref<128x128xf32, #tpu.memory_space<vmem>>, %arg3: memref<1x128xf32, #tpu.memory_space<vmem>>, %arg4: memref<128x128xf32, #tpu.memory_space<vmem>>, %arg5: memref<1x128xf32, #tpu.memory_space<vmem>>, %arg6: memref<128x128xf32, #tpu.memory_space<vmem>>, %arg7: memref<1x128xf32, #tpu.memory_space<vmem>>, %arg8: memref<64x128xf32, #tpu.memory_space<vmem>>) attributes {dimension_semantics = [], scalar_prefetch = 0 : i64, scratch_operands = 0 : i64, tpu.core_type = #tpu.core_type<tc>} {
    %c0 = arith.constant 0 : index
    %c0_0 = arith.constant 0 : index
    %0 = vector.load %arg1[%c0, %c0_0] : memref<64x64xf32, #tpu.memory_space<vmem>>, vector<64x64xf32>
    %c0_1 = arith.constant 0 : index
    %c0_2 = arith.constant 0 : index
    %1 = vector.load %arg0[%c0_1, %c0_2] : memref<64x128xf32, #tpu.memory_space<vmem>>, vector<64x128xf32>
    %c0_3 = arith.constant 0 : index
    %c0_4 = arith.constant 0 : index
    %2 = vector.load %arg2[%c0_3, %c0_4] : memref<128x128xf32, #tpu.memory_space<vmem>>, vector<128x128xf32>
    %c0_5 = arith.constant 0 : index
    %c0_6 = arith.constant 0 : index
    %3 = vector.load %arg3[%c0_5, %c0_6] : memref<1x128xf32, #tpu.memory_space<vmem>>, vector<1x128xf32>
    %cst = arith.constant dense<0.000000e+00> : vector<64x128xf32>
    %4 = tpu.matmul %1, %2, %cst {dimension_numbers = #tpu.dot_dimension_numbers<[1], [0], [0], [1], [0, 0, 1, 1], [], []>} : vector<64x128xf32>, vector<128x128xf32>, vector<64x128xf32> -> vector<64x128xf32>
    %cst_7 = arith.constant dense<0.000000e+00> : vector<64x128xf32>
    %5 = tpu.matmul %0, %4, %cst_7 {dimension_numbers = #tpu.dot_dimension_numbers<[1], [0], [0], [1], [0, 0, 1, 1], [], []>} : vector<64x64xf32>, vector<64x128xf32>, vector<64x128xf32> -> vector<64x128xf32>
    %6 = vector.broadcast %3 : vector<1x128xf32> to vector<64x128xf32>
    %7 = arith.addf %5, %6 : vector<64x128xf32>
    %cst_8 = arith.constant 0.000000e+00 : f32
    %8 = vector.broadcast %cst_8 : f32 to vector<64x128xf32>
    %9 = arith.maximumf %7, %8 : vector<64x128xf32>
    %c0_9 = arith.constant 0 : index
    %c0_10 = arith.constant 0 : index
    %10 = vector.load %arg4[%c0_9, %c0_10] : memref<128x128xf32, #tpu.memory_space<vmem>>, vector<128x128xf32>
    %c0_11 = arith.constant 0 : index
    %c0_12 = arith.constant 0 : index
    %11 = vector.load %arg5[%c0_11, %c0_12] : memref<1x128xf32, #tpu.memory_space<vmem>>, vector<1x128xf32>
    %cst_13 = arith.constant dense<0.000000e+00> : vector<64x128xf32>
    %12 = tpu.matmul %9, %10, %cst_13 {dimension_numbers = #tpu.dot_dimension_numbers<[1], [0], [0], [1], [0, 0, 1, 1], [], []>} : vector<64x128xf32>, vector<128x128xf32>, vector<64x128xf32> -> vector<64x128xf32>
    %cst_14 = arith.constant dense<0.000000e+00> : vector<64x128xf32>
    %13 = tpu.matmul %0, %12, %cst_14 {dimension_numbers = #tpu.dot_dimension_numbers<[1], [0], [0], [1], [0, 0, 1, 1], [], []>} : vector<64x64xf32>, vector<64x128xf32>, vector<64x128xf32> -> vector<64x128xf32>
    %14 = vector.broadcast %11 : vector<1x128xf32> to vector<64x128xf32>
    %15 = arith.addf %13, %14 : vector<64x128xf32>
    %cst_15 = arith.constant 0.000000e+00 : f32
    %16 = vector.broadcast %cst_15 : f32 to vector<64x128xf32>
    %17 = arith.maximumf %15, %16 : vector<64x128xf32>
    %c0_16 = arith.constant 0 : index
    %c0_17 = arith.constant 0 : index
    %18 = vector.load %arg6[%c0_16, %c0_17] : memref<128x128xf32, #tpu.memory_space<vmem>>, vector<128x128xf32>
    %c0_18 = arith.constant 0 : index
    %c0_19 = arith.constant 0 : index
    %19 = vector.load %arg7[%c0_18, %c0_19] : memref<1x128xf32, #tpu.memory_space<vmem>>, vector<1x128xf32>
    %cst_20 = arith.constant dense<0.000000e+00> : vector<64x128xf32>
    %20 = tpu.matmul %0, %17, %cst_20 {dimension_numbers = #tpu.dot_dimension_numbers<[1], [0], [0], [1], [0, 0, 1, 1], [], []>} : vector<64x64xf32>, vector<64x128xf32>, vector<64x128xf32> -> vector<64x128xf32>
    %cst_21 = arith.constant dense<0.000000e+00> : vector<64x128xf32>
    %21 = tpu.matmul %20, %18, %cst_21 {dimension_numbers = #tpu.dot_dimension_numbers<[1], [0], [0], [1], [0, 0, 1, 1], [], []>} : vector<64x128xf32>, vector<128x128xf32>, vector<64x128xf32> -> vector<64x128xf32>
    %22 = vector.broadcast %19 : vector<1x128xf32> to vector<64x128xf32>
    %23 = arith.addf %21, %22 : vector<64x128xf32>
    %c0_22 = arith.constant 0 : index
    %c0_23 = arith.constant 0 : index
    %24 = vector.load %arg8[%c0_22, %c0_23] : memref<64x128xf32, #tpu.memory_space<vmem>>, vector<64x128xf32>
    tpu.vector_store %arg8[%c0_22, %c0_23], %23 {strides = array<i32>} : memref<64x128xf32, #tpu.memory_space<vmem>>, vector<64x128xf32>,
    return
  }
}

</mosaic_0001>

<llo_original>
// kernel: tpu_custom_call.1
$region0: #{tpu_custom_call.1}
  #allocation0 [shape = 'u32[]', space=smem, size = 0x4, offset = 0x4, fixed_abs, tag = 'smem constant byte address 0x4 - core index']
  #allocation1 [shape = 'u32[72,128]{1,0:T(1,128)}', space=vmem, size = 0x9000, scoped, tag = 'internal scratch']
  %s0 = inlined_call_operand.hbm [shape: f32[64,128], index: 0, kind: input, shape index: {}]
  %s1 = inlined_call_operand.hbm [shape: f32[64,64], index: 1, kind: input, shape index: {}]
  %s2 = inlined_call_operand.hbm [shape: f32[128,128], index: 2, kind: input, shape index: {}]
  %s3 = inlined_call_operand.vmem [shape: f32[1,128], index: 3, kind: input, shape index: {}]
  %s4 = inlined_call_operand.hbm [shape: f32[128,128], index: 4, kind: input, shape index: {}]
  %s5 = inlined_call_operand.vmem [shape: f32[1,128], index: 5, kind: input, shape index: {}]
  %s6 = inlined_call_operand.hbm [shape: f32[128,128], index: 6, kind: input, shape index: {}]
  %s7 = inlined_call_operand.vmem [shape: f32[1,128], index: 7, kind: input, shape index: {}]
  %s8 = inlined_call_operand.hbm [shape: f32[64,128], index: 8, kind: output, shape index: {}]
  %s9 = sld [smem:[#allocation0]]
  $region62: #{tpu_custom_call.1} parent=0
    _
  %s11 = ssub.s32 1, %s9
  %s12 = scalar_select 0, %s11, %s9
  $region1: #{tpu_custom_call.1} parent=0
    #allocation2 [shape = 'u8[32768]{0}', space=vmem, size = 0x8000, scoped, tag = 'input window, operand 0, single buffered']
    #allocation3 [shape = 's32[1]{0}', space=sflag, size = 0x4, scoped, tag = 'scoped memory for tpu_custom_call.1']
    #allocation4 [shape = 's32[1]{0}', space=sflag, size = 0x4, scoped, tag = 'scoped memory for tpu_custom_call.1']
    #allocation5 [shape = 'u8[32768]{0}', space=vmem, size = 0x8000, scoped, tag = 'input window, operand 1, single buffered']
    #allocation6 [shape = 's32[1]{0}', space=sflag, size = 0x4, scoped, tag = 'scoped memory for tpu_custom_call.1']
    #allocation7 [shape = 'u8[65536]{0}', space=vmem, size = 0x10000, scoped, tag = 'input window, operand 2, single buffered']
    #allocation8 [shape = 'u8[65536]{0}', space=vmem, size = 0x10000, scoped, tag = 'input window, operand 4, single buffered']
    #allocation9 [shape = 's32[1]{0}', space=sflag, size = 0x4, scoped, tag = 'scoped memory for tpu_custom_call.1']
    #allocation10 [shape = 'u8[65536]{0}', space=vmem, size = 0x10000, scoped, tag = 'input window, operand 6, single buffered']
    #allocation11 [shape = 'u8[32768]{0}', space=vmem, size = 0x8000, scoped, tag = 'output window, operand 0, single buffered']
    %13 = vsyncpa [#allocation3], 0
    %14 = vsyncpa [#allocation6], 0
    %15 = vsyncpa [#allocation9], 0
    %16 = vsyncpa [#allocation4], 0
    // Predicated region
    $region2: #{tpu_custom_call.1} parent=1 // pred_check
      _
    $region3: #{tpu_custom_call.1} parent=1 // pred_check_branch
      %18 = sbr.rel (0) target = $region5
    $region4: #{tpu_custom_call.1} parent=1 // pred_region
      %20 = vsyncadd [#allocation3], 0
      %s21 = sshll.u32 %s0, 4
      %s22 = int_to_ptr.hbm [resolvable:$true] %s21
      %s23 = sshll.u32 [#allocation2], 4
      %s24 = int_to_ptr.vmem [resolvable:$true] %s23
      %29 = dma.hbm_to_vmem [thread:$0]  %s22, 1024, %s24, [#allocation3], 128, 128, 8
    $region5: #{tpu_custom_call.1} parent=1 // pred_fallthru
      _
    // Predicated region
    $region6: #{tpu_custom_call.1} parent=1 // pred_check
      _
    $region7: #{tpu_custom_call.1} parent=1 // pred_check_branch
      %31 = sbr.rel (0) target = $region9
    $region8: #{tpu_custom_call.1} parent=1 // pred_region
      %33 = vsyncadd [#allocation6], 0
      %s34 = sshll.u32 %s1, 4
      %s35 = int_to_ptr.hbm [resolvable:$true] %s34
      %s36 = sshll.u32 [#allocation5], 4
      %s37 = int_to_ptr.vmem [resolvable:$true] %s36
      %42 = dma.hbm_to_vmem [thread:$0]  %s35, 1024, %s37, [#allocation6], 128, 128, 8
    $region9: #{tpu_custom_call.1} parent=1 // pred_fallthru
      _
    // Predicated region
    $region10: #{tpu_custom_call.1} parent=1 // pred_check
      _
    $region11: #{tpu_custom_call.1} parent=1 // pred_check_branch
      %44 = sbr.rel (0) target = $region13
    $region12: #{tpu_custom_call.1} parent=1 // pred_region
      %46 = vsyncadd [#allocation6], 0
      %s47 = sshll.u32 %s2, 4
      %s48 = int_to_ptr.hbm [resolvable:$true] %s47
      %s49 = sshll.u32 [#allocation7], 4
      %s50 = int_to_ptr.vmem [resolvable:$true] %s49
      %55 = dma.hbm_to_vmem [thread:$0]  %s48, 2048, %s50, [#allocation6], 128, 128, 8
    $region13: #{tpu_custom_call.1} parent=1 // pred_fallthru
      _
    // Predicated region
    $region14: #{tpu_custom_call.1} parent=1 // pred_check
      _
    $region15: #{tpu_custom_call.1} parent=1 // pred_check_branch
      %57 = sbr.rel (0) target = $region17
    $region16: #{tpu_custom_call.1} parent=1 // pred_region
      _
    $region17: #{tpu_custom_call.1} parent=1 // pred_fallthru
      _
    // Predicated region
    $region18: #{tpu_custom_call.1} parent=1 // pred_check
      _
    $region19: #{tpu_custom_call.1} parent=1 // pred_check_branch
      %59 = sbr.rel (0) target = $region21
    $region20: #{tpu_custom_call.1} parent=1 // pred_region
      %61 = vsyncadd [#allocation9], 0
      %s62 = sshll.u32 %s4, 4
      %s63 = int_to_ptr.hbm [resolvable:$true] %s62
      %s64 = sshll.u32 [#allocation8], 4
      %s65 = int_to_ptr.vmem [resolvable:$true] %s64
      %70 = dma.hbm_to_vmem [thread:$0]  %s63, 2048, %s65, [#allocation9], 128, 128, 8
    $region21: #{tpu_custom_call.1} parent=1 // pred_fallthru
      _
    // Predicated region
    $region22: #{tpu_custom_call.1} parent=1 // pred_check
      _
    $region23: #{tpu_custom_call.1} parent=1 // pred_check_branch
      %72 = sbr.rel (0) target = $region25
    $region24: #{tpu_custom_call.1} parent=1 // pred_region
      _
    $region25: #{tpu_custom_call.1} parent=1 // pred_fallthru
      _
    // Predicated region
    $region26: #{tpu_custom_call.1} parent=1 // pred_check
      _
    $region27: #{tpu_custom_call.1} parent=1 // pred_check_branch
      %74 = sbr.rel (0) target = $region29
    $region28: #{tpu_custom_call.1} parent=1 // pred_region
      %76 = vsyncadd [#allocation9], 0
      %s77 = sshll.u32 %s6, 4
      %s78 = int_to_ptr.hbm [resolvable:$true] %s77
      %s79 = sshll.u32 [#allocation10], 4
      %s80 = int_to_ptr.vmem [resolvable:$true] %s79
      %85 = dma.hbm_to_vmem [thread:$0]  %s78, 2048, %s80, [#allocation9], 128, 128, 8
    $region29: #{tpu_custom_call.1} parent=1 // pred_fallthru
      _
    // Predicated region
    $region30: #{tpu_custom_call.1} parent=1 // pred_check
      _
    $region31: #{tpu_custom_call.1} parent=1 // pred_check_branch
      %87 = sbr.rel (0) target = $region33
    $region32: #{tpu_custom_call.1} parent=1 // pred_region
      _
    $region33: #{tpu_custom_call.1} parent=1 // pred_fallthru
      _
    // Predicated region
    $region34: #{tpu_custom_call.1} parent=1 // pred_check
      _
    $region35: #{tpu_custom_call.1} parent=1 // pred_check_branch
      %89 = sbr.rel (0) target = $region37
    $region36: #{tpu_custom_call.1} parent=1 // pred_region
      %91 = dma.done [#allocation3], 1024
    $region37: #{tpu_custom_call.1} parent=1 // pred_fallthru
      _
    // Predicated region
    $region38: #{tpu_custom_call.1} parent=1 // pred_check
      _
    $region39: #{tpu_custom_call.1} parent=1 // pred_check_branch
      %93 = sbr.rel (0) target = $region41
    $region40: #{tpu_custom_call.1} parent=1 // pred_region
      %95 = dma.done [#allocation6], 1024
    $region41: #{tpu_custom_call.1} parent=1 // pred_fallthru
      _
    // Predicated region
    $region42: #{tpu_custom_call.1} parent=1 // pred_check
      _
    $region43: #{tpu_custom_call.1} parent=1 // pred_check_branch
      %97 = sbr.rel (0) target = $region45
    $region44: #{tpu_custom_call.1} parent=1 // pred_region
      %99 = dma.done [#allocation6], 2048
    $region45: #{tpu_custom_call.1} parent=1 // pred_fallthru
      _
    // Predicated region
    $region46: #{tpu_custom_call.1} parent=1 // pred_check
      _
    $region47: #{tpu_custom_call.1} parent=1 // pred_check_branch
      %101 = sbr.rel (0) target = $region49
    $region48: #{tpu_custom_call.1} parent=1 // pred_region
      %103 = dma.done [#allocation9], 2048
    $region49: #{tpu_custom_call.1} parent=1 // pred_fallthru
      _
    // Predicated region
    $region50: #{tpu_custom_call.1} parent=1 // pred_check
      _
    $region51: #{tpu_custom_call.1} parent=1 // pred_check_branch
      %105 = sbr.rel (0) target = $region53
    $region52: #{tpu_custom_call.1} parent=1 // pred_region
      %107 = dma.done [#allocation9], 2048
    $region53: #{tpu_custom_call.1} parent=1 // pred_fallthru
      _
    %v108 = vld [vmem:[#allocation5] sm:$0xff]
    %v109 = vld [vmem:[#allocation5 + $0x8] sm:$0xff]
    %v110 = vld [vmem:[#allocation5 + $0x10] sm:$0xff]
    %v111 = vld [vmem:[#allocation5 + $0x18] sm:$0xff]
    %v112 = vld [vmem:[#allocation5 + $0x20] sm:$0xff]
    %v113 = vld [vmem:[#allocation5 + $0x28] sm:$0xff]
    %v114 = vld [vmem:[#allocation5 + $0x30] sm:$0xff]
    %v115 = vld [vmem:[#allocation5 + $0x38] sm:$0xff]
    %v116 = vld [vmem:[#allocation2] sm:$0xff]
    %v117 = vld [vmem:[#allocation2 + $0x8] sm:$0xff]
    %v118 = vld [vmem:[#allocation2 + $0x10] sm:$0xff]
    %v119 = vld [vmem:[#allocation2 + $0x18] sm:$0xff]
    %v120 = vld [vmem:[#allocation2 + $0x20] sm:$0xff]
    %v121 = vld [vmem:[#allocation2 + $0x28] sm:$0xff]
    %v122 = vld [vmem:[#allocation2 + $0x30] sm:$0xff]
    %v123 = vld [vmem:[#allocation2 + $0x38] sm:$0xff]
    %v124 = vld [vmem:[#allocation7] sm:$0xff]
    %v125 = vld [vmem:[#allocation7 + $0x8] sm:$0xff]
    %v126 = vld [vmem:[#allocation7 + $0x10] sm:$0xff]
    %v127 = vld [vmem:[#allocation7 + $0x18] sm:$0xff]
    %v128 = vld [vmem:[#allocation7 + $0x20] sm:$0xff]
    %v129 = vld [vmem:[#allocation7 + $0x28] sm:$0xff]
    %v130 = vld [vmem:[#allocation7 + $0x30] sm:$0xff]
    %v131 = vld [vmem:[#allocation7 + $0x38] sm:$0xff]
    %v132 = vld [vmem:[#allocation7 + $0x40] sm:$0xff]
    %v133 = vld [vmem:[#allocation7 + $0x48] sm:$0xff]
    %v134 = vld [vmem:[#allocation7 + $0x50] sm:$0xff]
    %v135 = vld [vmem:[#allocation7 + $0x58] sm:$0xff]
    %v136 = vld [vmem:[#allocation7 + $0x60] sm:$0xff]
    %v137 = vld [vmem:[#allocation7 + $0x68] sm:$0xff]
    %v138 = vld [vmem:[#allocation7 + $0x70] sm:$0xff]
    %v139 = vld [vmem:[#allocation7 + $0x78] sm:$0xff]
    %v140 = vld [vmem:[%s3] sm:$0x1]
    %141 = vmatpush.msra.mxu0 %v139
    %142 = vmatpush.msra.mxu0 %v138
    %143 = vmatpush.msra.mxu0 %v137
    %144 = vmatpush.msra.mxu0 %v136
    %145 = vmatpush.msra.mxu0 %v135
    %146 = vmatpush.msra.mxu0 %v134
    %147 = vmatpush.msra.mxu0 %v133
    %148 = vmatpush.msra.mxu0 %v132
    %149 = vmatpush.msra.mxu0 %v131
    %150 = vmatpush.msra.mxu0 %v130
    %151 = vmatpush.msra.mxu0 %v129
    %152 = vmatpush.msra.mxu0 %v128
    %153 = vmatpush.msra.mxu0 %v127
    %154 = vmatpush.msra.mxu0 %v126
    %155 = vmatpush.msra.mxu0 %v125
    %156 = vmatpush.msra.mxu0 %v124
    %157 = vmatmul.f32.gmra.mxu0 %v116
    %v158 = vpop.f32.mrf.mxu0
    %v159 = vadd.f32 0.0, %v158
    %160 = vmatmul.f32.gmra.mxu0 %v117
    %v161 = vpop.f32.mrf.mxu0
    %v162 = vadd.f32 0.0, %v161
    %163 = vmatmul.f32.gmra.mxu0 %v118
    %v164 = vpop.f32.mrf.mxu0
    %v165 = vadd.f32 0.0, %v164
    %166 = vmatmul.f32.gmra.mxu0 %v119
    %v167 = vpop.f32.mrf.mxu0
    %v168 = vadd.f32 0.0, %v167
    %169 = vmatmul.f32.gmra.mxu0 %v120
    %v170 = vpop.f32.mrf.mxu0
    %v171 = vadd.f32 0.0, %v170
    %172 = vmatmul.f32.gmra.mxu0 %v121
    %v173 = vpop.f32.mrf.mxu0
    %v174 = vadd.f32 0.0, %v173
    %175 = vmatmul.f32.gmra.mxu0 %v122
    %v176 = vpop.f32.mrf.mxu0
    %v177 = vadd.f32 0.0, %v176
    %178 = vmatmul.f32.gmra.mxu0 %v123
    %v179 = vpop.f32.mrf.mxu0
    %v180 = vadd.f32 0.0, %v179
    %181 = vdwg.mxu0
    %v183 = vperm.slane %v140, 0
    %vm185 = vcmask 523264
    %v187 = vsel %vm185, %v108, 0
    %v190 = vsel %vm185, %v109, 0
    %v193 = vsel %vm185, %v110, 0
    %v196 = vsel %vm185, %v111, 0
    %v199 = vsel %vm185, %v112, 0
    %v202 = vsel %vm185, %v113, 0
    %v205 = vsel %vm185, %v114, 0
    %v208 = vsel %vm185, %v115, 0
    %210 = vmatpush.msra.mxu0 0.0
    %211 = vmatpush.msra.mxu0 0.0
    %212 = vmatpush.msra.mxu0 0.0
    %213 = vmatpush.msra.mxu0 0.0
    %214 = vmatpush.msra.mxu0 0.0
    %215 = vmatpush.msra.mxu0 0.0
    %216 = vmatpush.msra.mxu0 0.0
    %217 = vmatpush.msra.mxu0 0.0
    %218 = vmatpush.msra.mxu0 %v180
    %219 = vmatpush.msra.mxu0 %v177
    %220 = vmatpush.msra.mxu0 %v174
    %221 = vmatpush.msra.mxu0 %v171
    %222 = vmatpush.msra.mxu0 %v168
    %223 = vmatpush.msra.mxu0 %v165
    %224 = vmatpush.msra.mxu0 %v162
    %225 = vmatpush.msra.mxu0 %v159
    %226 = vmatmul.f32.gmra.mxu0 %v187
    %v227 = vpop.f32.mrf.mxu0
    %v228 = vadd.f32 %v183, %v227
    %229 = vmatmul.f32.gmra.mxu0 %v190
    %v230 = vpop.f32.mrf.mxu0
    %v231 = vadd.f32 %v183, %v230
    %232 = vmatmul.f32.gmra.mxu0 %v193
    %v233 = vpop.f32.mrf.mxu0
    %v234 = vadd.f32 %v183, %v233
    %235 = vmatmul.f32.gmra.mxu0 %v196
    %v236 = vpop.f32.mrf.mxu0
    %v237 = vadd.f32 %v183, %v236
    %238 = vmatmul.f32.gmra.mxu0 %v199
    %v239 = vpop.f32.mrf.mxu0
    %v240 = vadd.f32 %v183, %v239
    %241 = vmatmul.f32.gmra.mxu0 %v202
    %v242 = vpop.f32.mrf.mxu0
    %v243 = vadd.f32 %v183, %v242
    %244 = vmatmul.f32.gmra.mxu0 %v205
    %v245 = vpop.f32.mrf.mxu0
    %v246 = vadd.f32 %v183, %v245
    %247 = vmatmul.f32.gmra.mxu0 %v208
    %v248 = vpop.f32.mrf.mxu0
    %v249 = vadd.f32 %v183, %v248
    %250 = vdwg.mxu0
    %v251 = vmax.f32 %v228, 0.0
    %v252 = vmax.f32 %v231, 0.0
    %v253 = vmax.f32 %v234, 0.0
    %v254 = vmax.f32 %v237, 0.0
    %v255 = vmax.f32 %v240, 0.0
    %v256 = vmax.f32 %v243, 0.0
    %v257 = vmax.f32 %v246, 0.0
    %v258 = vmax.f32 %v249, 0.0
    %v259 = vld [vmem:[#allocation8] sm:$0xff]
    %v260 = vld [vmem:[#allocation8 + $0x8] sm:$0xff]
    %v261 = vld [vmem:[#allocation8 + $0x10] sm:$0xff]
    %v262 = vld [vmem:[#allocation8 + $0x18] sm:$0xff]
    %v263 = vld [vmem:[#allocation8 + $0x20] sm:$0xff]
    %v264 = vld [vmem:[#allocation8 + $0x28] sm:$0xff]
    %v265 = vld [vmem:[#allocation8 + $0x30] sm:$0xff]
    %v266 = vld [vmem:[#allocation8 + $0x38] sm:$0xff]
    %v267 = vld [vmem:[#allocation8 + $0x40] sm:$0xff]
    %v268 = vld [vmem:[#allocation8 + $0x48] sm:$0xff]
    %v269 = vld [vmem:[#allocation8 + $0x50] sm:$0xff]
    %v270 = vld [vmem:[#allocation8 + $0x58] sm:$0xff]
    %v271 = vld [vmem:[#allocation8 + $0x60] sm:$0xff]
    %v272 = vld [vmem:[#allocation8 + $0x68] sm:$0xff]
    %v273 = vld [vmem:[#allocation8 + $0x70] sm:$0xff]
    %v274 = vld [vmem:[#allocation8 + $0x78] sm:$0xff]
    %v275 = vld [vmem:[%s5] sm:$0x1]
    %276 = vmatpush.msra.mxu0 %v274
    %277 = vmatpush.msra.mxu0 %v273
    %278 = vmatpush.msra.mxu0 %v272
    %279 = vmatpush.msra.mxu0 %v271
    %280 = vmatpush.msra.mxu0 %v270
    %281 = vmatpush.msra.mxu0 %v269
    %282 = vmatpush.msra.mxu0 %v268
    %283 = vmatpush.msra.mxu0 %v267
    %284 = vmatpush.msra.mxu0 %v266
    %285 = vmatpush.msra.mxu0 %v265
    %286 = vmatpush.msra.mxu0 %v264
    %287 = vmatpush.msra.mxu0 %v263
    %288 = vmatpush.msra.mxu0 %v262
    %289 = vmatpush.msra.mxu0 %v261
    %290 = vmatpush.msra.mxu0 %v260
    %291 = vmatpush.msra.mxu0 %v259
    %292 = vmatmul.f32.gmra.mxu0 %v251
    %v293 = vpop.f32.mrf.mxu0
    %v294 = vadd.f32 0.0, %v293
    %295 = vmatmul.f32.gmra.mxu0 %v252
    %v296 = vpop.f32.mrf.mxu0
    %v297 = vadd.f32 0.0, %v296
    %298 = vmatmul.f32.gmra.mxu0 %v253
    %v299 = vpop.f32.mrf.mxu0
    %v300 = vadd.f32 0.0, %v299
    %301 = vmatmul.f32.gmra.mxu0 %v254
    %v302 = vpop.f32.mrf.mxu0
    %v303 = vadd.f32 0.0, %v302
    %304 = vmatmul.f32.gmra.mxu0 %v255
    %v305 = vpop.f32.mrf.mxu0
    %v306 = vadd.f32 0.0, %v305
    %307 = vmatmul.f32.gmra.mxu0 %v256
    %v308 = vpop.f32.mrf.mxu0
    %v309 = vadd.f32 0.0, %v308
    %310 = vmatmul.f32.gmra.mxu0 %v257
    %v311 = vpop.f32.mrf.mxu0
    %v312 = vadd.f32 0.0, %v311
    %313 = vmatmul.f32.gmra.mxu0 %v258
    %v314 = vpop.f32.mrf.mxu0
    %v315 = vadd.f32 0.0, %v314
    %316 = vdwg.mxu0
    %v318 = vperm.slane %v275, 0
    %320 = vmatpush.msra.mxu0 0.0
    %321 = vmatpush.msra.mxu0 0.0
    %322 = vmatpush.msra.mxu0 0.0
    %323 = vmatpush.msra.mxu0 0.0
    %324 = vmatpush.msra.mxu0 0.0
    %325 = vmatpush.msra.mxu0 0.0
    %326 = vmatpush.msra.mxu0 0.0
    %327 = vmatpush.msra.mxu0 0.0
    %328 = vmatpush.msra.mxu0 %v315
    %329 = vmatpush.msra.mxu0 %v312
    %330 = vmatpush.msra.mxu0 %v309
    %331 = vmatpush.msra.mxu0 %v306
    %332 = vmatpush.msra.mxu0 %v303
    %333 = vmatpush.msra.mxu0 %v300
    %334 = vmatpush.msra.mxu0 %v297
    %335 = vmatpush.msra.mxu0 %v294
    %336 = vmatmul.f32.gmra.mxu0 %v187
    %v337 = vpop.f32.mrf.mxu0
    %v338 = vadd.f32 %v318, %v337
    %339 = vmatmul.f32.gmra.mxu0 %v190
    %v340 = vpop.f32.mrf.mxu0
    %v341 = vadd.f32 %v318, %v340
    %342 = vmatmul.f32.gmra.mxu0 %v193
    %v343 = vpop.f32.mrf.mxu0
    %v344 = vadd.f32 %v318, %v343
    %345 = vmatmul.f32.gmra.mxu0 %v196
    %v346 = vpop.f32.mrf.mxu0
    %v347 = vadd.f32 %v318, %v346
    %348 = vmatmul.f32.gmra.mxu0 %v199
    %v349 = vpop.f32.mrf.mxu0
    %v350 = vadd.f32 %v318, %v349
    %351 = vmatmul.f32.gmra.mxu0 %v202
    %v352 = vpop.f32.mrf.mxu0
    %v353 = vadd.f32 %v318, %v352
    %354 = vmatmul.f32.gmra.mxu0 %v205
    %v355 = vpop.f32.mrf.mxu0
    %v356 = vadd.f32 %v318, %v355
    %357 = vmatmul.f32.gmra.mxu0 %v208
    %v358 = vpop.f32.mrf.mxu0
    %v359 = vadd.f32 %v318, %v358
    %360 = vdwg.mxu0
    %v361 = vmax.f32 %v338, 0.0
    %v362 = vmax.f32 %v341, 0.0
    %v363 = vmax.f32 %v344, 0.0
    %v364 = vmax.f32 %v347, 0.0
    %v365 = vmax.f32 %v350, 0.0
    %v366 = vmax.f32 %v353, 0.0
    %v367 = vmax.f32 %v356, 0.0
    %v368 = vmax.f32 %v359, 0.0
    %v369 = vld [vmem:[#allocation10] sm:$0xff]
    %v370 = vld [vmem:[#allocation10 + $0x8] sm:$0xff]
    %v371 = vld [vmem:[#allocation10 + $0x10] sm:$0xff]
    %v372 = vld [vmem:[#allocation10 + $0x18] sm:$0xff]
    %v373 = vld [vmem:[#allocation10 + $0x20] sm:$0xff]
    %v374 = vld [vmem:[#allocation10 + $0x28] sm:$0xff]
    %v375 = vld [vmem:[#allocation10 + $0x30] sm:$0xff]
    %v376 = vld [vmem:[#allocation10 + $0x38] sm:$0xff]
    %v377 = vld [vmem:[#allocation10 + $0x40] sm:$0xff]
    %v378 = vld [vmem:[#allocation10 + $0x48] sm:$0xff]
    %v379 = vld [vmem:[#allocation10 + $0x50] sm:$0xff]
    %v380 = vld [vmem:[#allocation10 + $0x58] sm:$0xff]
    %v381 = vld [vmem:[#allocation10 + $0x60] sm:$0xff]
    %v382 = vld [vmem:[#allocation10 + $0x68] sm:$0xff]
    %v383 = vld [vmem:[#allocation10 + $0x70] sm:$0xff]
    %v384 = vld [vmem:[#allocation10 + $0x78] sm:$0xff]
    %v385 = vld [vmem:[%s7] sm:$0x1]
    %386 = vmatpush.msra.mxu0 0.0
    %387 = vmatpush.msra.mxu0 0.0
    %388 = vmatpush.msra.mxu0 0.0
    %389 = vmatpush.msra.mxu0 0.0
    %390 = vmatpush.msra.mxu0 0.0
    %391 = vmatpush.msra.mxu0 0.0
    %392 = vmatpush.msra.mxu0 0.0
    %393 = vmatpush.msra.mxu0 0.0
    %394 = vmatpush.msra.mxu0 %v368
    %395 = vmatpush.msra.mxu0 %v367
    %396 = vmatpush.msra.mxu0 %v366
    %397 = vmatpush.msra.mxu0 %v365
    %398 = vmatpush.msra.mxu0 %v364
    %399 = vmatpush.msra.mxu0 %v363
    %400 = vmatpush.msra.mxu0 %v362
    %401 = vmatpush.msra.mxu0 %v361
    %402 = vmatmul.f32.gmra.mxu0 %v187
    %v403 = vpop.f32.mrf.mxu0
    %v404 = vadd.f32 0.0, %v403
    %405 = vmatmul.f32.gmra.mxu0 %v190
    %v406 = vpop.f32.mrf.mxu0
    %v407 = vadd.f32 0.0, %v406
    %408 = vmatmul.f32.gmra.mxu0 %v193
    %v409 = vpop.f32.mrf.mxu0
    %v410 = vadd.f32 0.0, %v409
    %411 = vmatmul.f32.gmra.mxu0 %v196
    %v412 = vpop.f32.mrf.mxu0
    %v413 = vadd.f32 0.0, %v412
    %414 = vmatmul.f32.gmra.mxu0 %v199
    %v415 = vpop.f32.mrf.mxu0
    %v416 = vadd.f32 0.0, %v415
    %417 = vmatmul.f32.gmra.mxu0 %v202
    %v418 = vpop.f32.mrf.mxu0
    %v419 = vadd.f32 0.0, %v418
    %420 = vmatmul.f32.gmra.mxu0 %v205
    %v421 = vpop.f32.mrf.mxu0
    %v422 = vadd.f32 0.0, %v421
    %423 = vmatmul.f32.gmra.mxu0 %v208
    %v424 = vpop.f32.mrf.mxu0
    %v425 = vadd.f32 0.0, %v424
    %426 = vdwg.mxu0
    %v428 = vperm.slane %v385, 0
    %430 = vmatpush.msra.mxu0 %v384
    %431 = vmatpush.msra.mxu0 %v383
    %432 = vmatpush.msra.mxu0 %v382
    %433 = vmatpush.msra.mxu0 %v381
    %434 = vmatpush.msra.mxu0 %v380
    %435 = vmatpush.msra.mxu0 %v379
    %436 = vmatpush.msra.mxu0 %v378
    %437 = vmatpush.msra.mxu0 %v377
    %438 = vmatpush.msra.mxu0 %v376
    %439 = vmatpush.msra.mxu0 %v375
    %440 = vmatpush.msra.mxu0 %v374
    %441 = vmatpush.msra.mxu0 %v373
    %442 = vmatpush.msra.mxu0 %v372
    %443 = vmatpush.msra.mxu0 %v371
    %444 = vmatpush.msra.mxu0 %v370
    %445 = vmatpush.msra.mxu0 %v369
    %446 = vmatmul.f32.gmra.mxu0 %v404
    %v447 = vpop.f32.mrf.mxu0
    %v448 = vadd.f32 %v428, %v447
    %449 = vmatmul.f32.gmra.mxu0 %v407
    %v450 = vpop.f32.mrf.mxu0
    %v451 = vadd.f32 %v428, %v450
    %452 = vmatmul.f32.gmra.mxu0 %v410
    %v453 = vpop.f32.mrf.mxu0
    %v454 = vadd.f32 %v428, %v453
    %455 = vmatmul.f32.gmra.mxu0 %v413
    %v456 = vpop.f32.mrf.mxu0
    %v457 = vadd.f32 %v428, %v456
    %458 = vmatmul.f32.gmra.mxu0 %v416
    %v459 = vpop.f32.mrf.mxu0
    %v460 = vadd.f32 %v428, %v459
    %461 = vmatmul.f32.gmra.mxu0 %v419
    %v462 = vpop.f32.mrf.mxu0
    %v463 = vadd.f32 %v428, %v462
    %464 = vmatmul.f32.gmra.mxu0 %v422
    %v465 = vpop.f32.mrf.mxu0
    %v466 = vadd.f32 %v428, %v465
    %467 = vmatmul.f32.gmra.mxu0 %v425
    %v468 = vpop.f32.mrf.mxu0
    %v469 = vadd.f32 %v428, %v468
    %470 = vdwg.mxu0
    %471 = vst [vmem:[#allocation11] sm:$0xff] %v448
    %472 = vst [vmem:[#allocation11 + $0x8] sm:$0xff] %v451
    %473 = vst [vmem:[#allocation11 + $0x10] sm:$0xff] %v454
    %474 = vst [vmem:[#allocation11 + $0x18] sm:$0xff] %v457
    %475 = vst [vmem:[#allocation11 + $0x20] sm:$0xff] %v460
    %476 = vst [vmem:[#allocation11 + $0x28] sm:$0xff] %v463
    %477 = vst [vmem:[#allocation11 + $0x30] sm:$0xff] %v466
    %478 = vst [vmem:[#allocation11 + $0x38] sm:$0xff] %v469
    // Predicated region
    $region54: #{tpu_custom_call.1} parent=1 // pred_check
      _
    $region55: #{tpu_custom_call.1} parent=1 // pred_check_branch
      %480 = sbr.rel (0) target = $region57
    $region56: #{tpu_custom_call.1} parent=1 // pred_region
      %482 = vsyncadd [#allocation4], 0
      %s483 = sshll.u32 [#allocation11], 4
      %s484 = int_to_ptr.vmem [resolvable:$true] %s483
      %s485 = sshll.u32 %s8, 4
      %s486 = int_to_ptr.hbm [resolvable:$true] %s485
      %491 = dma.vmem_to_hbm [thread:$0]  %s484, 1024, %s486, [#allocation4], 128, 128, 8
    $region57: #{tpu_custom_call.1} parent=1 // pred_fallthru
      _
    // Predicated region
    $region58: #{tpu_custom_call.1} parent=1 // pred_check
      _
    $region59: #{tpu_custom_call.1} parent=1 // pred_check_branch
      %493 = sbr.rel (0) target = $region61
    $region60: #{tpu_custom_call.1} parent=1 // pred_region
      %495 = dma.done [#allocation4], 1024
    $region61: #{tpu_custom_call.1} parent=1 // pred_fallthru
      _
    %496 = vsyncpa [#allocation3], 1
    %497 = vsyncpa [#allocation6], 1
    %498 = vsyncpa [#allocation9], 1
    %499 = vsyncpa [#allocation4], 1

</llo_original>
